<compile_context>
chip_gen: v6e
topology: v6e:2x2x1
jax: 0.10.0
libtpu: 0.0.40
codegen_flags: <defaults>
</compile_context>

<pallas_src>
import numpy as np
import jax
import jax.numpy as jnp
from jax.experimental import pallas as pl
from jax.experimental.pallas import tpu as pltpu

PROB_SET = (0.1, 0.3, 0.55, 0.75)
NUM_BRANCHES = 2

_TARGET_BLOCK_BYTES = 2 * 1024 * 1024     # ~2 MiB x-block; (x + 2 outs) double-buffered ~12 MiB
_MAX_TILE_S = 32 * 1024                   # lane-tile cap (multiple of 128)
_VMEM_LIMIT_BYTES = 32 * 1024 * 1024      # safe on v5e / v6e / v7x


def _deficit_dropout_kernel(x_ref, m0_ref, m1_ref, o0_ref, o1_ref):
    """Fused 2-branch channel-wise dropout: one x read, two masked-scaled writes.

    x_ref         : VMEM (TILE_R, TILE_S) input rows (one row == one (n, c) channel slab)
    m0_ref, m1_ref: VMEM (TILE_R, 1)      precomputed per-row multiplier (1/(1-p) or 0)
    o0_ref, o1_ref: VMEM (TILE_R, TILE_S) branch outputs
    """
    x = x_ref[...]
    o0_ref[...] = (x * m0_ref[...]).astype(o0_ref.dtype)
    o1_ref[...] = (x * m1_ref[...]).astype(o1_ref.dtype)


def _round_up(a, m):
    return ((a + m - 1) // m) * m


def _choose_lane_tile(s_pad, max_tile=_MAX_TILE_S):
    """Largest multiple-of-128 divisor of s_pad that is <= max_tile."""
    if s_pad <= max_tile:
        return s_pad
    q = s_pad // 128
    best = 1
    d = 1
    while d * d <= q:
        if q % d == 0:
            for c in (d, q // d):
                if c * 128 <= max_tile and c > best:
                    best = c
        d += 1
    return best * 128


def _choose_row_tile(nc_pad, tile_s, dtype_bytes, target=_TARGET_BLOCK_BYTES):
    """Largest multiple-of-8 divisor of nc_pad keeping one block <= target bytes."""
    max_rows = max(8, target // max(1, tile_s * dtype_bytes))
    best = 8
    r = 8
    while r <= min(nc_pad, max_rows):
        if nc_pad % r == 0:
            best = r
        r += 8
    return best


def deficit_dropout_pair(x, p, key):
    """Pallas equivalent of TWO independent nn.Dropout3d(p)(x) applications (train mode).

    x: [N, C, D, H, W] float32.  Whole (n, c) channels are dropped with probability p,
    survivors scaled by 1/(1-p).  Returns (out_branch0, out_branch1).
    """
    N, C, D, H, W = x.shape
    NC = N * C
    S = D * H * W
    scale = 1.0 / (1.0 - p)

    # Per-(n, c) multipliers for both branches, computed once outside the kernel.
    keep = jax.random.bernoulli(key, 1.0 - p, (NUM_BRANCHES, NC))
    mult = keep.astype(x.dtype) * jnp.asarray(scale, x.dtype)           # (2, NC)

    # Rows = (n, c) channels, lanes = flattened volume (kept lane-dense).
    x2 = x.reshape(NC, S)
    S_pad = _round_up(S, 128)
    NC_pad = _round_up(NC, 8)
    if S_pad != S or NC_pad != NC:
        # Rare fallback (odd spatial dims / tiny channel counts); real V-Net features
        # have C >= 16 and power-of-two-ish volumes so this pad copy is normally skipped.
        x2 = jnp.pad(x2, ((0, NC_pad - NC), (0, S_pad - S)))
    if NC_pad != NC:
        mult = jnp.pad(mult, ((0, 0), (0, NC_pad - NC)))
    m0 = mult[0].reshape(NC_pad, 1)
    m1 = mult[1].reshape(NC_pad, 1)

    dtype_bytes = int(np.dtype(x.dtype).itemsize)
    tile_s = _choose_lane_tile(S_pad)
    tile_r = _choose_row_tile(NC_pad, tile_s, dtype_bytes)
    grid = (NC_pad // tile_r, S_pad // tile_s)

    x_spec = pl.BlockSpec((tile_r, tile_s), lambda i, j: (i, j))
    m_spec = pl.BlockSpec((tile_r, 1), lambda i, j: (i, 0))
    out_struct = jax.ShapeDtypeStruct((NC_pad, S_pad), x.dtype)

    cost = pl.CostEstimate(
        flops=2 * NC_pad * S_pad,
        transcendentals=0,
        bytes_accessed=3 * NC_pad * S_pad * dtype_bytes,
    )

    o0, o1 = pl.pallas_call(
        _deficit_dropout_kernel,
        out_shape=(out_struct, out_struct),
        grid=grid,
        in_specs=[x_spec, m_spec, m_spec],
        out_specs=(x_spec, x_spec),
        compiler_params=pltpu.CompilerParams(
            dimension_semantics=("parallel", "parallel"),
            vmem_limit_bytes=_VMEM_LIMIT_BYTES,
        ),
        cost_estimate=cost,
    )(x2, m0, m1)

    o0 = o0[:NC, :S].reshape(N, C, D, H, W)
    o1 = o1[:NC, :S].reshape(N, C, D, H, W)
    return o0, o1


def deficit_forward(feature_list, base_seed=0):
    """JAX/Pallas port of Deficit.forward.

    Picks p from PROB_SET (host RNG seeded by base_seed, mirroring random.choice) and
    applies NUM_BRANCHES independent channel-wise Dropout3d perturbations to every
    feature.  The two branches of each feature are fused into a single pallas_call.
    Returns (perturbed_results, selected_p) with perturbed_results[branch][feature_idx]
    matching the PyTorch structure.
    """
    rng = np.random.RandomState(base_seed)
    selected_p = float(PROB_SET[rng.randint(len(PROB_SET))])
    key = jax.random.PRNGKey(int(rng.randint(0, 2 ** 31 - 1)))

    perturbed_results = [[] for _ in range(NUM_BRANCHES)]
    for f in feature_list:
        key, sub = jax.random.split(key)
        o0, o1 = deficit_dropout_pair(f, selected_p, sub)
        perturbed_results[0].append(o0)
        perturbed_results[1].append(o1)
    return perturbed_results, selected_p


if __name__ == "__main__":
    key = jax.random.PRNGKey(0)
    k1, k2 = jax.random.split(key)

    # Small NCDHW decoder-style features (lane-dense: D*H*W is a multiple of 128).
    f1 = jax.random.normal(k1, (2, 4, 4, 8, 16), dtype=jnp.float32)   # S = 512
    f2 = jax.random.normal(k2, (2, 8, 2, 8, 8), dtype=jnp.float32)    # S = 128
    features = [f1, f2]

    results, p = deficit_forward(features, base_seed=0)
    results = jax.block_until_ready(results)

    # Sanity check: every (n, c) channel is either all-zero or exactly x / (1 - p).
    scale = 1.0 / (1.0 - p)
    for branch in results:
        for f, out in zip(features, branch):
            fn = np.asarray(f)
            fo = np.asarray(out)
            N, C = fn.shape[:2]
            for n in range(N):
                for c in range(C):
                    o, xi = fo[n, c], fn[n, c]
                    ok_drop = np.allclose(o, 0.0)
                    ok_keep = np.allclose(o, xi * scale, rtol=1e-5, atol=1e-5)
                    assert ok_drop or ok_keep, "channel neither dropped nor scaled"

    assert len(results) == NUM_BRANCHES
    assert all(len(b) == len(features) for b in results)
    print("KERNEL_OK")
</pallas_src>

<mosaic_0001>
module attributes {stable_mosaic.version = 11 : i64} {
  func.func @_deficit_dropout_kernel(%arg0: i32, %arg1: i32, %arg2: memref<8x512xf32, #tpu.memory_space<vmem>>, %arg3: memref<8x1xf32, #tpu.memory_space<vmem>>, %arg4: memref<8x1xf32, #tpu.memory_space<vmem>>, %arg5: memref<8x512xf32, #tpu.memory_space<vmem>>, %arg6: memref<8x512xf32, #tpu.memory_space<vmem>>) attributes {dimension_semantics = [#tpu.dimension_semantics<parallel>, #tpu.dimension_semantics<parallel>], iteration_bounds = array<i64: 1, 1>, scalar_prefetch = 0 : i64, scratch_operands = 0 : i64, tpu.core_type = #tpu.core_type<tc>, window_params = [{transform_indices = @transform_0, window_bounds = array<i64: 8, 512>}, {transform_indices = @transform_1, window_bounds = array<i64: 8, 1>}, {transform_indices = @transform_2, window_bounds = array<i64: 8, 1>}, {transform_indices = @transform_3, window_bounds = array<i64: 8, 512>}, {transform_indices = @transform_4, window_bounds = array<i64: 8, 512>}]} {
    %c0 = arith.constant 0 : index
    %c0_0 = arith.constant 0 : index
    %0 = vector.load %arg2[%c0, %c0_0] : memref<8x512xf32, #tpu.memory_space<vmem>>, vector<8x512xf32>
    %c0_1 = arith.constant 0 : index
    %c0_2 = arith.constant 0 : index
    %1 = vector.load %arg3[%c0_1, %c0_2] : memref<8x1xf32, #tpu.memory_space<vmem>>, vector<8x1xf32>
    %2 = vector.broadcast %1 : vector<8x1xf32> to vector<8x512xf32>
    %3 = arith.mulf %0, %2 : vector<8x512xf32>
    %c0_3 = arith.constant 0 : index
    %c0_4 = arith.constant 0 : index
    %4 = vector.load %arg5[%c0_3, %c0_4] : memref<8x512xf32, #tpu.memory_space<vmem>>, vector<8x512xf32>
    tpu.vector_store %arg5[%c0_3, %c0_4], %3 {strides = array<i32>} : memref<8x512xf32, #tpu.memory_space<vmem>>, vector<8x512xf32>,
    %c0_5 = arith.constant 0 : index
    %c0_6 = arith.constant 0 : index
    %5 = vector.load %arg4[%c0_5, %c0_6] : memref<8x1xf32, #tpu.memory_space<vmem>>, vector<8x1xf32>
    %6 = vector.broadcast %5 : vector<8x1xf32> to vector<8x512xf32>
    %7 = arith.mulf %0, %6 : vector<8x512xf32>
    %c0_7 = arith.constant 0 : index
    %c0_8 = arith.constant 0 : index
    %8 = vector.load %arg6[%c0_7, %c0_8] : memref<8x512xf32, #tpu.memory_space<vmem>>, vector<8x512xf32>
    tpu.vector_store %arg6[%c0_7, %c0_8], %7 {strides = array<i32>} : memref<8x512xf32, #tpu.memory_space<vmem>>, vector<8x512xf32>,
    return
  }
  func.func @transform_0(%arg0: i32, %arg1: i32) -> (i32, i32) {
    %c0_i32 = arith.constant 0 : i32
    return %arg0, %arg1 : i32, i32
  }
  func.func @transform_1(%arg0: i32, %arg1: i32) -> (i32, i32) {
    %c0_i32 = arith.constant 0 : i32
    %c0_i32_0 = arith.constant 0 : i32
    return %arg0, %c0_i32 : i32, i32
  }
  func.func @transform_2(%arg0: i32, %arg1: i32) -> (i32, i32) {
    %c0_i32 = arith.constant 0 : i32
    %c0_i32_0 = arith.constant 0 : i32
    return %arg0, %c0_i32 : i32, i32
  }
  func.func @transform_3(%arg0: i32, %arg1: i32) -> (i32, i32) {
    %c0_i32 = arith.constant 0 : i32
    return %arg0, %arg1 : i32, i32
  }
  func.func @transform_4(%arg0: i32, %arg1: i32) -> (i32, i32) {
    %c0_i32 = arith.constant 0 : i32
    return %arg0, %arg1 : i32, i32
  }
}

</mosaic_0001>

<llo_original>
// kernel: tpu_custom_call.1
$region0: #{tpu_custom_call.1}
  #allocation0 [shape = 'u32[]', space=smem, size = 0x4, offset = 0x4, fixed_abs, tag = 'smem constant byte address 0x4 - core index']
  #allocation1 [shape = 'u32[144,128]{1,0:T(1,128)}', space=vmem, size = 0x12000, scoped, tag = 'internal scratch']
  %s0 = inlined_call_operand.hbm [shape: f32[8,512], index: 0, kind: input, shape index: {}]
  %s1 = inlined_call_operand.vmem [shape: f32[8,1], index: 1, kind: input, shape index: {}]
  %s2 = inlined_call_operand.vmem [shape: f32[8,1], index: 2, kind: input, shape index: {}]
  %s3 = inlined_call_operand.hbm [shape: f32[8,512], index: 3, kind: output, shape index: {0}]
  %s4 = inlined_call_operand.hbm [shape: f32[8,512], index: 4, kind: output, shape index: {1}]
  %5 = xla_tuple %s3, %s4
  %s6 = sld [smem:[#allocation0]]
  $region34: #{tpu_custom_call.1} parent=0
    _
  %s8 = ssub.s32 1, %s6
  %s9 = scalar_select 0, %s8, %s6
  $region1: #{tpu_custom_call.1} parent=0
    #allocation2 [shape = 'u8[16384]{0}', space=vmem, size = 0x4000, scoped, tag = 'input window, operand 0, single buffered']
    #allocation3 [shape = 's32[1]{0}', space=sflag, size = 0x4, scoped, tag = 'scoped memory for tpu_custom_call.1']
    #allocation4 [shape = 's32[1]{0}', space=sflag, size = 0x4, scoped, tag = 'scoped memory for tpu_custom_call.1']
    #allocation5 [shape = 'u8[16384]{0}', space=vmem, size = 0x4000, scoped, tag = 'output window, operand 0, single buffered']
    #allocation6 [shape = 'u8[16384]{0}', space=vmem, size = 0x4000, scoped, tag = 'output window, operand 1, single buffered']
    #allocation7 [shape = 's32[1]{0}', space=sflag, size = 0x4, scoped, tag = 'scoped memory for tpu_custom_call.1']
    %10 = vsyncpa [#allocation3], 0
    %11 = vsyncpa [#allocation4], 0
    %12 = vsyncpa [#allocation7], 0
    // Predicated region
    $region2: #{tpu_custom_call.1} parent=1 // pred_check
      _
    $region3: #{tpu_custom_call.1} parent=1 // pred_check_branch
      %14 = sbr.rel (0) target = $region5
    $region4: #{tpu_custom_call.1} parent=1 // pred_region
      %s16 = ssub.s32 512, 512
      %17 = vsyncadd [#allocation3], %s16
      %s19 = sshll.u32 [#allocation2], 4
      %s20 = int_to_ptr.vmem [resolvable:$true] %s19
      %22 = dma.hbm_to_vmem [thread:$0]  %s0, 512, %s20, [#allocation3]
    $region5: #{tpu_custom_call.1} parent=1 // pred_fallthru
      _
    // Predicated region
    $region6: #{tpu_custom_call.1} parent=1 // pred_check
      _
    $region7: #{tpu_custom_call.1} parent=1 // pred_check_branch
      %24 = sbr.rel (0) target = $region9
    $region8: #{tpu_custom_call.1} parent=1 // pred_region
      _
    $region9: #{tpu_custom_call.1} parent=1 // pred_fallthru
      _
    // Predicated region
    $region10: #{tpu_custom_call.1} parent=1 // pred_check
      _
    $region11: #{tpu_custom_call.1} parent=1 // pred_check_branch
      %26 = sbr.rel (0) target = $region13
    $region12: #{tpu_custom_call.1} parent=1 // pred_region
      _
    $region13: #{tpu_custom_call.1} parent=1 // pred_fallthru
      _
    // Predicated region
    $region14: #{tpu_custom_call.1} parent=1 // pred_check
      _
    $region15: #{tpu_custom_call.1} parent=1 // pred_check_branch
      %28 = sbr.rel (0) target = $region17
    $region16: #{tpu_custom_call.1} parent=1 // pred_region
      %29 = dma.done [#allocation3], 512
    $region17: #{tpu_custom_call.1} parent=1 // pred_fallthru
      _
    %v30 = vld [vmem:[#allocation2] sm:$0xff]
    %v31 = vld [vmem:[#allocation2 + $0x8] sm:$0xff]
    %v32 = vld [vmem:[#allocation2 + $0x10] sm:$0xff]
    %v33 = vld [vmem:[#allocation2 + $0x18] sm:$0xff]
    %v34 = vld [vmem:[%s1] sm:$0xff]
    %36 = vset.pattern.permute.xlu0 0
    %37 = vperm.xlu0 %36, %v34
    %v38 = vpop.permute.xlu0 %37
    %v40 = vmul.f32 %v30, %v38
    %v41 = vmul.f32 %v31, %v38
    %v42 = vmul.f32 %v32, %v38
    %v43 = vmul.f32 %v33, %v38
    %44 = vst [vmem:[#allocation5] sm:$0xff] %v40
    %45 = vst [vmem:[#allocation5 + $0x8] sm:$0xff] %v41
    %46 = vst [vmem:[#allocation5 + $0x10] sm:$0xff] %v42
    %47 = vst [vmem:[#allocation5 + $0x18] sm:$0xff] %v43
    %v48 = vld [vmem:[%s2] sm:$0xff]
    %50 = vset.pattern.permute.xlu0 0
    %51 = vperm.xlu0 %50, %v48
    %v52 = vpop.permute.xlu0 %51
    %v54 = vmul.f32 %v30, %v52
    %v55 = vmul.f32 %v31, %v52
    %v56 = vmul.f32 %v32, %v52
    %v57 = vmul.f32 %v33, %v52
    %58 = vst [vmem:[#allocation6] sm:$0xff] %v54
    %59 = vst [vmem:[#allocation6 + $0x8] sm:$0xff] %v55
    %60 = vst [vmem:[#allocation6 + $0x10] sm:$0xff] %v56
    %61 = vst [vmem:[#allocation6 + $0x18] sm:$0xff] %v57
    // Predicated region
    $region18: #{tpu_custom_call.1} parent=1 // pred_check
      _
    $region19: #{tpu_custom_call.1} parent=1 // pred_check_branch
      %63 = sbr.rel (0) target = $region21
    $region20: #{tpu_custom_call.1} parent=1 // pred_region
      %s65 = ssub.s32 512, 512
      %66 = vsyncadd [#allocation4], %s65
      %s68 = sshll.u32 [#allocation5], 4
      %s69 = int_to_ptr.vmem [resolvable:$true] %s68
      %71 = dma.vmem_to_hbm [thread:$0]  %s69, 512, %s3, [#allocation4]
    $region21: #{tpu_custom_call.1} parent=1 // pred_fallthru
      _
    // Predicated region
    $region22: #{tpu_custom_call.1} parent=1 // pred_check
      _
    $region23: #{tpu_custom_call.1} parent=1 // pred_check_branch
      %73 = sbr.rel (0) target = $region25
    $region24: #{tpu_custom_call.1} parent=1 // pred_region
      %s75 = ssub.s32 512, 512
      %76 = vsyncadd [#allocation7], %s75
      %s78 = sshll.u32 [#allocation6], 4
      %s79 = int_to_ptr.vmem [resolvable:$true] %s78
      %81 = dma.vmem_to_hbm [thread:$0]  %s79, 512, %s4, [#allocation7]
    $region25: #{tpu_custom_call.1} parent=1 // pred_fallthru
      _
    // Predicated region
    $region26: #{tpu_custom_call.1} parent=1 // pred_check
      _
    $region27: #{tpu_custom_call.1} parent=1 // pred_check_branch
      %83 = sbr.rel (0) target = $region29
    $region28: #{tpu_custom_call.1} parent=1 // pred_region
      %84 = dma.done [#allocation4], 512
    $region29: #{tpu_custom_call.1} parent=1 // pred_fallthru
      _
    // Predicated region
    $region30: #{tpu_custom_call.1} parent=1 // pred_check
      _
    $region31: #{tpu_custom_call.1} parent=1 // pred_check_branch
      %86 = sbr.rel (0) target = $region33
    $region32: #{tpu_custom_call.1} parent=1 // pred_region
      %87 = dma.done [#allocation7], 512
    $region33: #{tpu_custom_call.1} parent=1 // pred_fallthru
      _
    %88 = vsyncpa [#allocation3], 1
    %89 = vsyncpa [#allocation4], 1
    %90 = vsyncpa [#allocation7], 1

</llo_original>
